<compile_context>
chip_gen: v7x
topology: tpu7x:2x2x1
jax: 0.10.0
libtpu: 0.0.40
codegen_flags: <defaults>
</compile_context>

<pallas_src>
import functools
import math

import jax
import jax.numpy as jnp
from jax.experimental import pallas as pl
from jax.experimental.pallas import tpu as pltpu


def _round_up(a, b):
    return (a + b - 1) // b * b


def _cdiv(a, b):
    return -(-a // b)


def _vmem_budget():
    """(per-input-block byte target, scoped vmem limit) keyed off the chip.

    v5e/v6e: 128 MiB physical VMEM -> ~16 MiB blocks, 96 MiB limit.
    v7x:      64 MiB physical VMEM -> ~8 MiB blocks, 48 MiB limit
    (double-buffered input + cast temporaries + accumulator must fit).
    """
    phys = 64 << 20  # conservative default = smallest (v7x)
    try:
        phys = int(pltpu.get_tpu_info().vmem_capacity_bytes)
    except Exception:
        pass
    if phys >= (100 << 20):
        return 16 << 20, 96 << 20
    return 8 << 20, 48 << 20


def _choose_tm(rows, bytes_per_row, target_block_bytes, sublane, tm_cap=4096):
    """Row-tile size: biggest sublane-aligned tm under the byte budget."""
    tm = target_block_bytes // max(bytes_per_row, 1)
    tm = (tm // sublane) * sublane
    tm = max(tm, sublane)
    tm = min(tm, tm_cap)
    # Keep >= 2 row tiles whenever possible so the "parallel" row axis can be
    # sharded across v7x's two TensorCores; costs at most one extra ~0.35us
    # grid step on single-TC v5e/v6e.
    if rows >= 2 * sublane:
        tm = min(tm, _round_up((rows + 1) // 2, sublane))
    if tm >= rows:
        tm = rows  # single full-dim block (any size allowed when == dim)
    return tm


# ---------------------------------------------------------------------------
# Kernels
# ---------------------------------------------------------------------------

def _gap_single_kernel(x_ref, o_ref, *, inv_hw):
    """One block spans the whole H*W axis: sum + scale + store."""
    x = x_ref[...].astype(jnp.float32)
    o_ref[...] = (jnp.sum(x, axis=-1, keepdims=True) * inv_hw).astype(o_ref.dtype)


def _gap_acc_kernel(x_ref, o_ref, acc_ref, *, inv_hw, hw, mask_lanes):
    """H*W streamed over grid axis 1 with a lane-dense (tm, 128) f32 accumulator."""
    j = pl.program_id(1)

    @pl.when(j == 0)
    def _():
        acc_ref[...] = jnp.zeros_like(acc_ref)

    x = x_ref[...].astype(jnp.float32)
    tm, tk = x.shape  # tk is a multiple of 128 on this path
    if mask_lanes:
        # Last lane tile may run past H*W (no HBM padding) -> zero OOB lanes.
        lane = jax.lax.broadcasted_iota(jnp.int32, (tm, tk), 1) + j * tk
        x = jnp.where(lane < hw, x, 0.0)

    # Fold tk lanes into 128 with plain VPU adds (lane-aligned static slices);
    # the single cross-lane (XLU) reduce is deferred to the finalize step.
    n_chunks = tk // 128
    part = x[:, 0:128]
    for c in range(1, n_chunks):
        part = part + x[:, c * 128:(c + 1) * 128]
    acc_ref[...] += part

    @pl.when(j == pl.num_programs(1) - 1)
    def _():
        o_ref[...] = (jnp.sum(acc_ref[...], axis=-1, keepdims=True)
                      * inv_hw).astype(o_ref.dtype)


def _gap_fold_kernel(x_ref, ones_ref, o_ref, *, inv_hw, hi_lo):
    """k channels folded per row; per-segment sums via block-diag ones matmul.

    DEFAULT MXU precision only.  For f32 inputs, a hi/lo bf16 split gives
    near-f32 accuracy at 2 native bf16 passes (vs ~6 for Precision.HIGHEST).
    """
    ones = ones_ref[...]  # bf16, exact 0/1
    x = x_ref[...]
    if hi_lo:
        x_hi = x.astype(jnp.bfloat16)
        x_lo = (x - x_hi.astype(jnp.float32)).astype(jnp.bfloat16)
        s = jnp.dot(x_hi, ones, preferred_element_type=jnp.float32)
        s = s + jnp.dot(x_lo, ones, preferred_element_type=jnp.float32)
    else:
        s = jnp.dot(x, ones, preferred_element_type=jnp.float32)
    o_ref[...] = (s * inv_hw).astype(o_ref.dtype)


# ---------------------------------------------------------------------------
# Wrapper
# ---------------------------------------------------------------------------

def global_avg_pool2d(x, *, target_block_bytes=None, fold_max_width=8192,
                      max_tk=4096):
    """Equivalent of F.avg_pool2d(x, kernel_size=x.size()[2:]) for NCHW input."""
    N, C, H, W = x.shape
    NC, HW = N * C, H * W
    inv_hw = 1.0 / float(HW)
    dtype = x.dtype
    itemsize = jnp.dtype(dtype).itemsize
    sublane = max(8, 32 // itemsize)  # 8 for f32, 16 for bf16, 32 for int8

    auto_block, vmem_limit = _vmem_budget()
    if target_block_bytes is None:
        target_block_bytes = auto_block

    x2 = x.reshape(NC, HW)  # contiguous reshape: free, no HBM copy

    # ---- fold path: small, 128-misaligned H*W (e.g. 7x7 classifier heads) ----
    k = 128 // math.gcd(HW, 128)  # smallest k with (k*HW) % 128 == 0
    use_fold = (
        k > 1
        and NC % k == 0                 # folded reshape stays a free bitcast
        and (NC // k) >= 16             # keep the MXU M dim comfortably tiled
        and k * HW <= fold_max_width
        and (dtype == jnp.float32 or dtype == jnp.bfloat16)
    )

    if use_fold:
        rows, width = NC // k, k * HW
        xr = x2.reshape(rows, width)    # contiguous -> free
        tm = _choose_tm(rows, width * itemsize, target_block_bytes, 16)
        grid_m = _cdiv(rows, tm)
        # Block-diagonal ones (bf16, exact): column j sums lanes [j*HW, (j+1)*HW).
        seg = jnp.arange(width, dtype=jnp.int32) // HW
        ones_blk = (seg[:, None] == jnp.arange(k, dtype=jnp.int32)[None, :]
                    ).astype(jnp.bfloat16)

        out = pl.pallas_call(
            functools.partial(_gap_fold_kernel, inv_hw=inv_hw,
                              hi_lo=(dtype == jnp.float32)),
            out_shape=jax.ShapeDtypeStruct((rows, k), dtype),
            grid=(grid_m,),
            in_specs=[
                pl.BlockSpec((tm, width), lambda i: (i, 0)),
                pl.BlockSpec((width, k), lambda i: (0, 0)),  # fetched once
            ],
            out_specs=pl.BlockSpec((tm, k), lambda i: (i, 0)),
            compiler_params=pltpu.CompilerParams(
                dimension_semantics=("parallel",),
                vmem_limit_bytes=vmem_limit),
        )(xr, ones_blk)
        return out.reshape(N, C, 1, 1)

    lane_w = _round_up(HW, 128)  # VMEM lane footprint of one full row

    if lane_w * itemsize * sublane <= target_block_bytes:
        # ---- single block spans the whole H*W axis (last dim == full array
        #      dim: no 128-alignment requirement, no padding, exact traffic) --
        tm = _choose_tm(NC, lane_w * itemsize, target_block_bytes, sublane)
        grid_m = _cdiv(NC, tm)
        out = pl.pallas_call(
            functools.partial(_gap_single_kernel, inv_hw=inv_hw),
            out_shape=jax.ShapeDtypeStruct((NC, 1), dtype),
            grid=(grid_m,),
            in_specs=[pl.BlockSpec((tm, HW), lambda i: (i, 0))],
            out_specs=pl.BlockSpec((tm, 1), lambda i: (i, 0)),
            compiler_params=pltpu.CompilerParams(
                dimension_semantics=("parallel",),
                vmem_limit_bytes=vmem_limit),
        )(x2)
        return out.reshape(N, C, 1, 1)

    # ---- H*W tiled accumulator path (very large spatial extents) -------------
    tk = min(max_tk, target_block_bytes // (sublane * itemsize))
    tk = max(128, (tk // 128) * 128)
    tk = min(tk, lane_w)
    grid_k = _cdiv(HW, tk)
    mask_lanes = (HW % tk) != 0          # last lane tile partial -> mask in-kernel
    tm = _choose_tm(NC, tk * itemsize, target_block_bytes, sublane)
    grid_m = _cdiv(NC, tm)

    out = pl.pallas_call(
        functools.partial(_gap_acc_kernel, inv_hw=inv_hw, hw=HW,
                          mask_lanes=mask_lanes),
        out_shape=jax.ShapeDtypeStruct((NC, 1), dtype),
        grid=(grid_m, grid_k),
        in_specs=[pl.BlockSpec((tm, tk), lambda i, j: (i, j))],
        out_specs=pl.BlockSpec((tm, 1), lambda i, j: (i, 0)),
        scratch_shapes=[pltpu.VMEM((tm, 128), jnp.float32)],
        compiler_params=pltpu.CompilerParams(
            dimension_semantics=("parallel", "arbitrary"),
            vmem_limit_bytes=vmem_limit),
    )(x2)
    return out.reshape(N, C, 1, 1)


if __name__ == "__main__":
    key = jax.random.PRNGKey(0)
    k0, k1, k2, k3 = jax.random.split(key, 4)

    # Primary: small NCHW input consistent with the module's forward.
    x = jax.random.normal(k0, (2, 4, 16, 16), dtype=jnp.float32)
    y = jax.block_until_ready(global_avg_pool2d(x))
    ref = jnp.mean(x, axis=(2, 3), keepdims=True)
    assert y.shape == (2, 4, 1, 1), y.shape
    assert jnp.allclose(y, ref, atol=1e-5, rtol=1e-5), "mismatch (primary)"

    # Larger spatial extent -> single-block row-sum path (no padding).
    xb = jax.random.normal(k1, (1, 2, 96, 96), dtype=jnp.float32)
    yb = jax.block_until_ready(global_avg_pool2d(xb))
    refb = jnp.mean(xb, axis=(2, 3), keepdims=True)
    assert jnp.allclose(yb, refb, atol=1e-5, rtol=1e-5), "mismatch (single)"

    # Same input forced through the streaming accumulator path (grid_k > 1,
    # masked partial last lane tile, lane-dense accumulator).
    yb2 = jax.block_until_ready(global_avg_pool2d(xb, target_block_bytes=64 << 10))
    assert jnp.allclose(yb2, refb, atol=1e-5, rtol=1e-5), "mismatch (tiled HW)"

    # Classifier-head shape (7x7) with NC % 128 == 0 -> MXU fold path.
    # f32 input (not snapped): validates the hi/lo bf16 split accuracy.
    xc = jax.random.normal(k2, (2, 1024, 7, 7), dtype=jnp.float32)
    yc = jax.block_until_ready(global_avg_pool2d(xc))
    refc = jnp.mean(xc, axis=(2, 3), keepdims=True)
    assert jnp.allclose(yc, refc, atol=5e-4, rtol=1e-4), "mismatch (fold)"

    # Misaligned small HW where the fold factor doesn't divide NC -> unfolded
    # full-HW-block path (no padding, exact HBM traffic).
    xd = jax.random.normal(k3, (2, 3, 7, 7), dtype=jnp.float32)
    yd = jax.block_until_ready(global_avg_pool2d(xd))
    refd = jnp.mean(xd, axis=(2, 3), keepdims=True)
    assert jnp.allclose(yd, refd, atol=1e-5, rtol=1e-5), "mismatch (unaligned)"

    print("KERNEL_OK")
</pallas_src>

<mosaic_0001>
module attributes {stable_mosaic.version = 11 : i64} {
  func.func @_gap_single_kernel(%arg0: i32, %arg1: memref<8x256xf32, #tpu.memory_space<vmem>>, %arg2: memref<8x1xf32, #tpu.memory_space<vmem>>) attributes {dimension_semantics = [#tpu.dimension_semantics<parallel>], iteration_bounds = array<i64: 1>, scalar_prefetch = 0 : i64, scratch_operands = 0 : i64, tpu.core_type = #tpu.core_type<tc>, window_params = [{transform_indices = @transform_0, window_bounds = array<i64: 8, 256>}, {transform_indices = @transform_1, window_bounds = array<i64: 8, 1>}]} {
    %c0 = arith.constant 0 : index
    %c0_0 = arith.constant 0 : index
    %0 = vector.load %arg1[%c0, %c0_0] : memref<8x256xf32, #tpu.memory_space<vmem>>, vector<8x256xf32>
    %cst = arith.constant dense<0.000000e+00> : vector<8xf32>
    %1 = vector.multi_reduction <add>, %0, %cst [1] : vector<8x256xf32> to vector<8xf32>
    %2 = vector.shape_cast %1 : vector<8xf32> to vector<8x1xf32>
    %cst_1 = arith.constant 3.906250e-03 : f32
    %3 = vector.broadcast %cst_1 : f32 to vector<8x1xf32>
    %4 = arith.mulf %2, %3 : vector<8x1xf32>
    %c0_2 = arith.constant 0 : index
    %c0_3 = arith.constant 0 : index
    %5 = vector.load %arg2[%c0_2, %c0_3] : memref<8x1xf32, #tpu.memory_space<vmem>>, vector<8x1xf32>
    tpu.vector_store %arg2[%c0_2, %c0_3], %4 {strides = array<i32>} : memref<8x1xf32, #tpu.memory_space<vmem>>, vector<8x1xf32>,
    return
  }
  func.func @transform_0(%arg0: i32) -> (i32, i32) {
    %c0_i32 = arith.constant 0 : i32
    %c0_i32_0 = arith.constant 0 : i32
    return %arg0, %c0_i32 : i32, i32
  }
  func.func @transform_1(%arg0: i32) -> (i32, i32) {
    %c0_i32 = arith.constant 0 : i32
    %c0_i32_0 = arith.constant 0 : i32
    return %arg0, %c0_i32 : i32, i32
  }
}

</mosaic_0001>

<llo_original>
// kernel: tpu_custom_call.1
$region0: #{tpu_custom_call.1}
  #allocation0 [shape = 'u32[]', space=smem, size = 0x4, offset = 0x4, fixed_abs, tag = 'smem constant byte address 0x4 - core index']
  #allocation1 [shape = 'u32[144,128]{1,0:T(1,128)}', space=vmem, size = 0x12000, scoped, tag = 'internal scratch']
  %s0 = inlined_call_operand.hbm [shape: f32[8,256], index: 0, kind: input, shape index: {}]
  %s1 = inlined_call_operand.vmem [shape: f32[8,1], index: 1, kind: output, shape index: {}]
  %s2 = sld [smem:[#allocation0]]
  $region18: #{tpu_custom_call.1} parent=0
    _
  %s4 = ssub.s32 1, %s2
  %s5 = scalar_select 0, %s4, %s2
  $region1: #{tpu_custom_call.1} parent=0
    #allocation2 [shape = 'u8[8192]{0}', space=vmem, size = 0x2000, scoped, tag = 'input window, operand 0, single buffered']
    #allocation3 [shape = 's32[1]{0}', space=sflag, size = 0x4, scoped, tag = 'scoped memory for tpu_custom_call.1']
    %6 = vsyncpa [#allocation3], 0
    // Predicated region
    $region2: #{tpu_custom_call.1} parent=1 // pred_check
      _
    $region3: #{tpu_custom_call.1} parent=1 // pred_check_branch
      %8 = sbr.rel (0) target = $region5
    $region4: #{tpu_custom_call.1} parent=1 // pred_region
      %s10 = ssub.s32 256, 256
      %11 = vsyncadd [#allocation3], %s10
      %s13 = sshll.u32 [#allocation2], 4
      %s14 = int_to_ptr.vmem [resolvable:$true] %s13
      %16 = dma.hbm_to_vmem [thread:$0]  %s0, 256, %s14, [#allocation3]
    $region5: #{tpu_custom_call.1} parent=1 // pred_fallthru
      _
    // Predicated region
    $region6: #{tpu_custom_call.1} parent=1 // pred_check
      _
    $region7: #{tpu_custom_call.1} parent=1 // pred_check_branch
      %18 = sbr.rel (0) target = $region9
    $region8: #{tpu_custom_call.1} parent=1 // pred_region
      %19 = dma.done [#allocation3], 256
    $region9: #{tpu_custom_call.1} parent=1 // pred_fallthru
      _
    %v20 = vld [vmem:[#allocation2] sm:$0xff]
    %v21 = vld [vmem:[#allocation2 + $0x8] sm:$0xff]
    %v22 = vadd.f32 %v20, %v21
    %23 = vadd.xlane.f32.xlu0 %v22
    %v24 = vpop.xlane.xlu0 %23
    %v25 = vmul.f32 %v24, 0.00390625
    %vm26 = vcmask 7168
    %27 = vst.msk [vmem:[%s1] sm:$0xff] %vm26, %v25
    // Predicated region
    $region10: #{tpu_custom_call.1} parent=1 // pred_check
      _
    $region11: #{tpu_custom_call.1} parent=1 // pred_check_branch
      %29 = sbr.rel (0) target = $region13
    $region12: #{tpu_custom_call.1} parent=1 // pred_region
      _
    $region13: #{tpu_custom_call.1} parent=1 // pred_fallthru
      _
    // Predicated region
    $region14: #{tpu_custom_call.1} parent=1 // pred_check
      _
    $region15: #{tpu_custom_call.1} parent=1 // pred_check_branch
      %31 = sbr.rel (0) target = $region17
    $region16: #{tpu_custom_call.1} parent=1 // pred_region
      _
    $region17: #{tpu_custom_call.1} parent=1 // pred_fallthru
      _
    %32 = vsyncpa [#allocation3], 1

</llo_original>
